<compile_context>
chip_gen: v7x
topology: tpu7x:2x2x1
jax: 0.10.0
libtpu: 0.0.40
codegen_flags: <defaults>
</compile_context>

<pallas_src>
import jax
import jax.numpy as jnp
from jax import lax
from jax.experimental import pallas as pl
from jax.experimental.pallas import tpu as pltpu


def _attention_kernel(fbox_ref, k_ref, kp_ref, f_ref, wb_ref, b_ref, o_ref):
    """One (batch, query-tile) grid step.  All position axes are lane-major.

    fbox_ref: (1, C, TQ)  bf16  3x3 box-summed foreground at the query tile
    k_ref:    (1, C, HW)  bf16  normalized per-position keys (resident per batch)
    kp_ref:   (1, C, HW)  bf16  combiner_wa @ keys (resident per batch)
    f_ref:    (1, C, TQ)  f32   raw foreground at the query tile (combiner branch)
    wb_ref:   (C, C)      f32   combiner weight acting on the raw foreground
    b_ref:    (C, 1)      f32   combiner bias
    o_ref:    (1, C, TQ)  f32   output tile (channels x query positions, lane-dense)
    """
    # Box-filtered similarity scores s[p, q] = sum_c K[c, p] * fbox[c, q]
    # (bf16 MXU operands, f32 accumulation).
    s = lax.dot_general(k_ref[0], fbox_ref[0], (((0,), (0,)), ((), ())),
                        preferred_element_type=jnp.float32)          # (HW, TQ)

    # Softmax over the kernel index p (sublane axis); normalization is deferred
    # until after the MXU contraction below.
    mx = jnp.max(s, axis=0, keepdims=True)                           # (1, TQ)
    e = jnp.exp(s - mx)                                              # (HW, TQ) f32
    denom = jnp.sum(e, axis=0, keepdims=True)                        # (1, TQ)

    # out[c, q] = sum_p K'[c, p] * e[p, q]   (combiner_wa already folded into K').
    # TODO(synk): for very large HW, stream the p axis with an online-softmax loop
    # over p-chunks of the resident keys instead of materializing (HW, TQ) scores.
    out_ct = jnp.dot(kp_ref[0], e.astype(jnp.bfloat16),
                     preferred_element_type=jnp.float32)             # (C, TQ)
    out_ct = out_ct * pl.reciprocal(denom, approx=True)

    # Remaining half of the fused 1x1 combiner: wb @ foreground + bias.
    y = (out_ct
         + jnp.dot(wb_ref[...], f_ref[0], preferred_element_type=jnp.float32)
         + b_ref[...])                                               # (C, TQ)
    o_ref[0] = y.astype(o_ref.dtype)


def _vmem_limit_bytes():
    # Generation-aware VMEM ceiling: ~3/4 of physical capacity, capped at 96 MiB.
    # (v5e/v6e: 128 MiB physical; v7x: 64 MiB; default scoped limit is 16-32 MiB.)
    try:
        cap = int(pltpu.get_tpu_info().vmem_capacity_bytes)
    except Exception:
        cap = 64 * 1024 * 1024
    return min((cap * 3) // 4, 96 * 1024 * 1024)


def _tile_vmem_bytes(HW, C, TQ):
    score = HW * TQ * (4 + 4 + 2)                 # s, e (f32), e cast to bf16
    blocks = 2 * (2 * C * HW * 2                  # K, K' bf16 (double-buffered)
                  + C * TQ * (2 + 4 + 4))         # fbox / f / out blocks
    return score + blocks


def _pick_query_tile(HW, C, budget):
    # Output tile must be a 128-multiple (lane-dense, unmasked stores) unless it
    # is the whole position axis.
    if HW % 128 != 0:
        return HW
    for cand in (512, 256, 128):
        if HW % cand == 0 and _tile_vmem_bytes(HW, C, cand) <= budget:
            return cand
    return 128


def attention_module_forward(foreground, mask, combiner_w, combiner_b):
    """foreground: (B, C, H, W), mask: (B, 1, H, W) (NCHW, same spatial size).

    combiner_w: (C, 2C)  (PyTorch nn.Conv2d(2C, C, 1) weight squeezed)
    combiner_b: (C,)
    """
    # TODO(synk): att_scores_prev / masks_prev carry state across forward calls in
    # the PyTorch module; this implements the first call (state is None), where
    # `mask` and the `ratio` parameter do not influence the output.
    del mask
    B, C, H, W = foreground.shape
    HW = H * W

    f_cm = foreground.reshape(B, C, HW).astype(jnp.float32)          # channel-major

    # Normalized per-position keys (the "conv_kernels" of the PyTorch module),
    # computed once per batch; combiner's first-half weight is folded into them.
    k = f_cm + 1e-7
    k = k * lax.rsqrt(jnp.sum(k * k, axis=1, keepdims=True))          # (B, C, HW)
    wa = combiner_w[:, :C].astype(jnp.float32)                        # on attention out
    wb = combiner_w[:, C:].astype(jnp.float32)                        # on raw foreground
    kp = jnp.einsum('oc,bcp->bop', wa, k)                             # (B, C, HW)
    k_bf = k.astype(jnp.bfloat16)
    kp_bf = kp.astype(jnp.bfloat16)

    # 3x3 box-sum of the foreground: by linearity of the 1x1 similarity conv this
    # equals avg_pool2d(conv_result, 3, 1, padding=1) * 9 applied after the conv.
    fpad = jnp.pad(foreground.astype(jnp.float32), ((0, 0), (0, 0), (1, 1), (1, 1)))
    fbox = sum(fpad[:, :, dy:dy + H, dx:dx + W]
               for dy in range(3) for dx in range(3))
    fbox_bf = fbox.reshape(B, C, HW).astype(jnp.bfloat16)

    bias = combiner_b.reshape(C, 1).astype(jnp.float32)

    vmem_limit = _vmem_limit_bytes()
    TQ = _pick_query_tile(HW, C, (vmem_limit * 4) // 5)
    n_q = HW // TQ

    cost = pl.CostEstimate(
        flops=int(B * (4 * HW * HW * C + 2 * C * C * HW)),
        transcendentals=int(B * HW * HW),
        bytes_accessed=int(B * C * HW * (2 + 2 + 2 + 4 + 4)),
    )

    out = pl.pallas_call(
        _attention_kernel,
        out_shape=jax.ShapeDtypeStruct((B, C, HW), jnp.float32),
        grid=(B, n_q),
        in_specs=[
            pl.BlockSpec((1, C, TQ), lambda b, t: (b, 0, t)),   # fbox (per tile)
            pl.BlockSpec((1, C, HW), lambda b, t: (b, 0, 0)),   # K    (per batch)
            pl.BlockSpec((1, C, HW), lambda b, t: (b, 0, 0)),   # K'   (per batch)
            pl.BlockSpec((1, C, TQ), lambda b, t: (b, 0, t)),   # f    (per tile)
            pl.BlockSpec((C, C), lambda b, t: (0, 0)),          # wb
            pl.BlockSpec((C, 1), lambda b, t: (0, 0)),          # bias
        ],
        out_specs=pl.BlockSpec((1, C, TQ), lambda b, t: (b, 0, t)),
        compiler_params=pltpu.CompilerParams(
            dimension_semantics=("parallel", "parallel"),
            vmem_limit_bytes=int(vmem_limit)),
        cost_estimate=cost,
    )(fbox_bf, k_bf, kp_bf, f_cm, wb, bias)
    return out.reshape(B, C, H, W)


def reference_forward(foreground, combiner_w, combiner_b):
    """Pure-JAX transcription of the PyTorch forward (first call, state=None)."""
    B, C, H, W = foreground.shape
    HW = H * W
    outs = []
    for i in range(B):
        Fi = foreground[i].reshape(C, HW)
        K = Fi.T + 1e-7
        K = K / jnp.sqrt(jnp.sum(K ** 2, axis=1, keepdims=True))
        S = K @ Fi                                   # (HW, HW): S[p, q]
        Ssp = S.reshape(HW, H, W)
        pad = jnp.pad(Ssp, ((0, 0), (1, 1), (1, 1)))
        box = sum(pad[:, dy:dy + H, dx:dx + W]
                  for dy in range(3) for dx in range(3))
        A = jax.nn.softmax(box.reshape(HW, HW), axis=0)
        out_i = jnp.einsum('pq,pc->cq', A, K).reshape(C, H, W)
        outs.append(out_i)
    att = jnp.stack(outs, axis=0)
    cat = jnp.concatenate([att, foreground], axis=1)
    return (jnp.einsum('oc,bchw->bohw', combiner_w, cat)
            + combiner_b[None, :, None, None])


def _run_check(B, C, H, W):
    key = jax.random.PRNGKey(0)
    k_fg, k_mask, k_w, k_b = jax.random.split(key, 4)
    foreground = jax.random.normal(k_fg, (B, C, H, W), dtype=jnp.float32)
    mask = (jax.random.uniform(k_mask, (B, 1, H, W)) > 0.5).astype(jnp.float32)
    # deterministic init for nn.Conv2d(2C, C, kernel_size=1)
    combiner_w = 0.1 * jax.random.normal(k_w, (C, 2 * C), dtype=jnp.float32)
    combiner_b = 0.1 * jax.random.normal(k_b, (C,), dtype=jnp.float32)

    out = attention_module_forward(foreground, mask, combiner_w, combiner_b)
    out = jax.block_until_ready(out)

    ref = reference_forward(foreground, combiner_w, combiner_b)
    assert out.shape == (B, C, H, W)
    assert jnp.allclose(out, ref, atol=1e-2, rtol=1e-2), (
        float(jnp.max(jnp.abs(out - ref))))


if __name__ == "__main__":
    _run_check(2, 4, 16, 16)   # single query tile per batch element
    _run_check(1, 4, 32, 32)   # multi-tile path (TQ < HW)
    print("KERNEL_OK")
</pallas_src>

<mosaic_0001>
module attributes {stable_mosaic.version = 11 : i64} {
  func.func @_attention_kernel(%arg0: i32, %arg1: i32, %arg2: memref<1x4x256xbf16, #tpu.memory_space<vmem>>, %arg3: memref<1x4x256xbf16, #tpu.memory_space<vmem>>, %arg4: memref<1x4x256xbf16, #tpu.memory_space<vmem>>, %arg5: memref<1x4x256xf32, #tpu.memory_space<vmem>>, %arg6: memref<4x4xf32, #tpu.memory_space<vmem>>, %arg7: memref<4x1xf32, #tpu.memory_space<vmem>>, %arg8: memref<1x4x256xf32, #tpu.memory_space<vmem>>) attributes {dimension_semantics = [#tpu.dimension_semantics<parallel>, #tpu.dimension_semantics<parallel>], iteration_bounds = array<i64: 2, 1>, scalar_prefetch = 0 : i64, scratch_operands = 0 : i64, tpu.core_type = #tpu.core_type<tc>, window_params = [{transform_indices = @transform_0, window_bounds = array<i64: 1, 4, 256>}, {transform_indices = @transform_1, window_bounds = array<i64: 1, 4, 256>}, {transform_indices = @transform_2, window_bounds = array<i64: 1, 4, 256>}, {transform_indices = @transform_3, window_bounds = array<i64: 1, 4, 256>}, {pipeline_mode = #tpu.pipeline_mode<synchronous>, transform_indices = @transform_4, window_bounds = array<i64: 4, 4>}, {pipeline_mode = #tpu.pipeline_mode<synchronous>, transform_indices = @transform_5, window_bounds = array<i64: 4, 1>}, {transform_indices = @transform_6, window_bounds = array<i64: 1, 4, 256>}]} {
    %c0 = arith.constant 0 : index
    %c0_0 = arith.constant 0 : index
    %c0_1 = arith.constant 0 : index
    %0 = vector.load %arg3[%c0, %c0_0, %c0_1] : memref<1x4x256xbf16, #tpu.memory_space<vmem>>, vector<1x4x256xbf16>
    %1 = vector.shape_cast %0 : vector<1x4x256xbf16> to vector<4x256xbf16>
    %c0_2 = arith.constant 0 : index
    %c0_3 = arith.constant 0 : index
    %c0_4 = arith.constant 0 : index
    %2 = vector.load %arg2[%c0_2, %c0_3, %c0_4] : memref<1x4x256xbf16, #tpu.memory_space<vmem>>, vector<1x4x256xbf16>
    %3 = vector.shape_cast %2 : vector<1x4x256xbf16> to vector<4x256xbf16>
    %cst = arith.constant dense<0.000000e+00> : vector<256x256xf32>
    %4 = tpu.matmul %1, %3, %cst {dimension_numbers = #tpu.dot_dimension_numbers<[0], [0], [1], [1], [0, 1, 1, 1], [], []>} : vector<4x256xbf16>, vector<4x256xbf16>, vector<256x256xf32> -> vector<256x256xf32>
    %cst_5 = arith.constant dense<0xFF800000> : vector<256xf32>
    %5 = vector.multi_reduction <maximumf>, %4, %cst_5 [0] : vector<256x256xf32> to vector<256xf32>
    %6 = vector.shape_cast %5 : vector<256xf32> to vector<1x256xf32>
    %7 = vector.broadcast %6 : vector<1x256xf32> to vector<256x256xf32>
    %8 = arith.subf %4, %7 : vector<256x256xf32>
    %9 = math.exp %8 : vector<256x256xf32>
    %cst_6 = arith.constant dense<0.000000e+00> : vector<256xf32>
    %10 = vector.multi_reduction <add>, %9, %cst_6 [0] : vector<256x256xf32> to vector<256xf32>
    %11 = vector.shape_cast %10 : vector<256xf32> to vector<1x256xf32>
    %c0_7 = arith.constant 0 : index
    %c0_8 = arith.constant 0 : index
    %c0_9 = arith.constant 0 : index
    %12 = vector.load %arg4[%c0_7, %c0_8, %c0_9] : memref<1x4x256xbf16, #tpu.memory_space<vmem>>, vector<1x4x256xbf16>
    %13 = vector.shape_cast %12 : vector<1x4x256xbf16> to vector<4x256xbf16>
    %14 = arith.truncf %9 : vector<256x256xf32> to vector<256x256xbf16>
    %cst_10 = arith.constant dense<0.000000e+00> : vector<4x256xf32>
    %15 = tpu.matmul %13, %14, %cst_10 {dimension_numbers = #tpu.dot_dimension_numbers<[1], [0], [0], [1], [0, 0, 1, 1], [], []>} : vector<4x256xbf16>, vector<256x256xbf16>, vector<4x256xf32> -> vector<4x256xf32>
    %16 = tpu.reciprocal %11 {approx = true} : vector<1x256xf32> -> vector<1x256xf32>
    %17 = vector.broadcast %16 : vector<1x256xf32> to vector<4x256xf32>
    %18 = arith.mulf %15, %17 : vector<4x256xf32>
    %c0_11 = arith.constant 0 : index
    %c0_12 = arith.constant 0 : index
    %19 = vector.load %arg6[%c0_11, %c0_12] : memref<4x4xf32, #tpu.memory_space<vmem>>, vector<4x4xf32>
    %c0_13 = arith.constant 0 : index
    %c0_14 = arith.constant 0 : index
    %c0_15 = arith.constant 0 : index
    %20 = vector.load %arg5[%c0_13, %c0_14, %c0_15] : memref<1x4x256xf32, #tpu.memory_space<vmem>>, vector<1x4x256xf32>
    %21 = vector.shape_cast %20 : vector<1x4x256xf32> to vector<4x256xf32>
    %cst_16 = arith.constant dense<0.000000e+00> : vector<4x256xf32>
    %22 = tpu.matmul %19, %21, %cst_16 {dimension_numbers = #tpu.dot_dimension_numbers<[1], [0], [0], [1], [0, 0, 1, 1], [], []>} : vector<4x4xf32>, vector<4x256xf32>, vector<4x256xf32> -> vector<4x256xf32>
    %23 = arith.addf %18, %22 : vector<4x256xf32>
    %c0_17 = arith.constant 0 : index
    %c0_18 = arith.constant 0 : index
    %24 = vector.load %arg7[%c0_17, %c0_18] : memref<4x1xf32, #tpu.memory_space<vmem>>, vector<4x1xf32>
    %25 = vector.broadcast %24 : vector<4x1xf32> to vector<4x256xf32>
    %26 = arith.addf %23, %25 : vector<4x256xf32>
    %c0_19 = arith.constant 0 : index
    %c0_20 = arith.constant 0 : index
    %c0_21 = arith.constant 0 : index
    %27 = vector.load %arg8[%c0_19, %c0_20, %c0_21] : memref<1x4x256xf32, #tpu.memory_space<vmem>>, vector<1x4x256xf32>
    %28 = vector.shape_cast %27 : vector<1x4x256xf32> to vector<4x256xf32>
    %29 = vector.shape_cast %26 : vector<4x256xf32> to vector<1x4x256xf32>
    tpu.vector_store %arg8[%c0_19, %c0_20, %c0_21], %29 {strides = array<i32>} : memref<1x4x256xf32, #tpu.memory_space<vmem>>, vector<1x4x256xf32>,
    return
  }
  func.func @transform_0(%arg0: i32, %arg1: i32) -> (i32, i32, i32) {
    %c0_i32 = arith.constant 0 : i32
    %c0_i32_0 = arith.constant 0 : i32
    return %arg0, %c0_i32, %arg1 : i32, i32, i32
  }
  func.func @transform_1(%arg0: i32, %arg1: i32) -> (i32, i32, i32) {
    %c0_i32 = arith.constant 0 : i32
    %c0_i32_0 = arith.constant 0 : i32
    %c0_i32_1 = arith.constant 0 : i32
    return %arg0, %c0_i32, %c0_i32_0 : i32, i32, i32
  }
  func.func @transform_2(%arg0: i32, %arg1: i32) -> (i32, i32, i32) {
    %c0_i32 = arith.constant 0 : i32
    %c0_i32_0 = arith.constant 0 : i32
    %c0_i32_1 = arith.constant 0 : i32
    return %arg0, %c0_i32, %c0_i32_0 : i32, i32, i32
  }
  func.func @transform_3(%arg0: i32, %arg1: i32) -> (i32, i32, i32) {
    %c0_i32 = arith.constant 0 : i32
    %c0_i32_0 = arith.constant 0 : i32
    return %arg0, %c0_i32, %arg1 : i32, i32, i32
  }
  func.func @transform_4(%arg0: i32, %arg1: i32) -> (i32, i32) {
    %c0_i32 = arith.constant 0 : i32
    %c0_i32_0 = arith.constant 0 : i32
    %c0_i32_1 = arith.constant 0 : i32
    return %c0_i32, %c0_i32_0 : i32, i32
  }
  func.func @transform_5(%arg0: i32, %arg1: i32) -> (i32, i32) {
    %c0_i32 = arith.constant 0 : i32
    %c0_i32_0 = arith.constant 0 : i32
    %c0_i32_1 = arith.constant 0 : i32
    return %c0_i32, %c0_i32_0 : i32, i32
  }
  func.func @transform_6(%arg0: i32, %arg1: i32) -> (i32, i32, i32) {
    %c0_i32 = arith.constant 0 : i32
    %c0_i32_0 = arith.constant 0 : i32
    return %arg0, %c0_i32, %arg1 : i32, i32, i32
  }
}

</mosaic_0001>

<llo_original>
// kernel: tpu_custom_call.1
$region0: #{tpu_custom_call.1}
  #allocation0 [shape = 'u32[]', space=smem, size = 0x4, offset = 0x4, fixed_abs, tag = 'smem constant byte address 0x4 - core index']
  #allocation1 [shape = 'u32[144,128]{1,0:T(1,128)}', space=vmem, size = 0x12000, scoped, tag = 'internal scratch']
  %s0 = inlined_call_operand.hbm [shape: bf16[2,4,256], index: 0, kind: input, shape index: {}]
  %s1 = inlined_call_operand.hbm [shape: bf16[2,4,256], index: 1, kind: input, shape index: {}]
  %s2 = inlined_call_operand.hbm [shape: bf16[2,4,256], index: 2, kind: input, shape index: {}]
  %s3 = inlined_call_operand.hbm [shape: f32[2,4,256], index: 3, kind: input, shape index: {}]
  %s4 = inlined_call_operand.vmem [shape: f32[4,4], index: 4, kind: input, shape index: {}]
  %s5 = inlined_call_operand.vmem [shape: f32[4,1], index: 5, kind: input, shape index: {}]
  %s6 = inlined_call_operand.hbm [shape: f32[2,4,256], index: 6, kind: output, shape index: {}]
  %s7 = sld [smem:[#allocation0]]
  $region73: #{tpu_custom_call.1} parent=0
    _
  %s9 = ssub.s32 1, %s7
  %s10 = scalar_select 0, %s9, %s7
  $region1: #{tpu_custom_call.1} parent=0
    #allocation2 [shape = 'u8[4096]{0}', space=vmem, size = 0x1000, scoped, tag = 'input window, operand 0']
    #allocation3 [shape = 's32[2]{0}', space=sflag, size = 0x8, scoped, tag = 'scoped memory for tpu_custom_call.1']
    #allocation4 [shape = 's32[2]{0}', space=sflag, size = 0x8, scoped, tag = 'scoped memory for tpu_custom_call.1']
    #allocation5 [shape = 'u8[4096]{0}', space=vmem, size = 0x1000, scoped, tag = 'input window, operand 1']
    #allocation6 [shape = 's32[2]{0}', space=sflag, size = 0x8, scoped, tag = 'scoped memory for tpu_custom_call.1']
    #allocation7 [shape = 'u8[4096]{0}', space=vmem, size = 0x1000, scoped, tag = 'input window, operand 2']
    #allocation8 [shape = 'u8[8192]{0}', space=vmem, size = 0x2000, scoped, tag = 'input window, operand 3']
    #allocation9 [shape = 's32[2]{0}', space=sflag, size = 0x8, scoped, tag = 'scoped memory for tpu_custom_call.1']
    #allocation10 [shape = 'u8[8192]{0}', space=vmem, size = 0x2000, scoped, tag = 'output window, operand 0']
    %11 = vsyncpa [#allocation3], 0
    %s12 = scalar_lea.sflag [#allocation3], 1
    %13 = vsyncpa %s12, 0
    %14 = vsyncpa [#allocation6], 0
    %s15 = scalar_lea.sflag [#allocation6], 1
    %16 = vsyncpa %s15, 0
    %17 = vsyncpa [#allocation9], 0
    %s18 = scalar_lea.sflag [#allocation9], 1
    %19 = vsyncpa %s18, 0
    %20 = vsyncpa [#allocation4], 0
    %s21 = scalar_lea.sflag [#allocation4], 1
    %22 = vsyncpa %s21, 0
    loop: start=0, step=1, limit=4
    $region2: #{tpu_custom_call.1} parent=1 // loop_pre_header
      _
    $region3: #{tpu_custom_call.1} parent=1 // loop_header
      %s24 = sphi 0, %s28
      %p25 = scmp.ge.s32.totalorder %s24, 4
      %s31 = sphi 0, %s43
      %s32 = sphi 0, %s39
      %s33 = sphi 0, %s31
      %s34 = sphi 0, %s32
      %s35 = sphi 0, %s33
      %s36 = sphi 0, %s34
      %s48 = sphi 0, %s50
      %s51 = sphi 0, %s48
      %s52 = sphi 0, %s51
      %s68 = sphi 0, %s52
      %s74 = sphi 0, %s76
      %s77 = sphi 0, %s74
      %s78 = sphi 0, %s77
      %s94 = sphi 0, %s78
      %s100 = sphi 0, %s102
      %s103 = sphi 0, %s100
      %s104 = sphi 0, %s103
      %s120 = sphi 0, %s104
      %s128 = sphi 0, %s130
      %s131 = sphi 0, %s128
      %s132 = sphi 0, %s131
      %s148 = sphi 0, %s132
      %s152 = sphi 0, %s152
      %s154 = sphi 0, %s152
      %s155 = sphi 0, %s154
      %s169 = sphi 0, %s155
      %s173 = sphi 0, %s173
      %s175 = sphi 0, %s173
      %s176 = sphi 0, %s175
      %s190 = sphi 0, %s176
      %s198 = sphi 0, %s200
      %s201 = sphi 0, %s198
      %s202 = sphi 0, %s201
      %s218 = sphi 0, %s202
    $region4: #{tpu_custom_call.1} parent=1 // loop_header_branch
      %27 = sbr.rel (%p25) target = $region8
    $region5: #{tpu_custom_call.1} parent=1 // loop_body
      %s29 = ssub.s32 %s24, 1
      %s30 = ssub.s32 %s24, 2
      %s37 = sadd.s32 1, %s32
      %p38 = scmp.ge.s32.totalorder %s37, 1
      %s39 = scalar_select %p38, 0, %s37
      %s40 = sadd.s32 1, %s31
      %s41 = scalar_select %p38, %s40, %s31
      %p42 = scmp.ge.s32.totalorder %s41, 2
      %s43 = scalar_select %p42, 0, %s41
      %s44 = ssub.s32 %s31, %s43
      %s45 = ssub.s32 %s32, %s39
      %s46 = sor.u32 %s44, %s45
      %p47 = scmp.eq.s32.totalorder %s46, 0
      %s49 = sadd.s32 %s48, 1
      %s50 = scalar_select %p47, %s48, %s49
      %p53 = pneg %p47
      %p54 = scmp.eq.s32.totalorder %s24, 1
      %p55 = por %p53, %p54
      %p56 = scmp.ne.s32.totalorder %s48, %s51
      %p57 = scmp.eq.s32.totalorder %s24, 0
      %p58 = por %p56, %p57
      %p59 = scmp.ne.s32.totalorder %s48, %s51
      %p60 = scmp.eq.s32.totalorder %s29, 1
      %p61 = por %p59, %p60
      %p62 = scmp.ne.s32.totalorder %s51, %s52
      %p63 = scmp.eq.s32.totalorder %s29, 0
      %p64 = por %p62, %p63
      %p65 = scmp.ne.s32.totalorder %s51, %s52
      %p66 = scmp.eq.s32.totalorder %s30, 1
      %p67 = por %p65, %p66
      %p69 = scmp.ne.s32.totalorder %s52, %s68
      %p70 = scmp.eq.s32.totalorder %s30, 0
      %p71 = por %p69, %p70
      %s72 = ssub.s32 %s31, %s43
      %p73 = scmp.eq.s32.totalorder %s72, 0
      %s75 = sadd.s32 %s74, 1
      %s76 = scalar_select %p73, %s74, %s75
      %p79 = pneg %p73
      %p80 = scmp.eq.s32.totalorder %s24, 1
      %p81 = por %p79, %p80
      %p82 = scmp.ne.s32.totalorder %s74, %s77
      %p83 = scmp.eq.s32.totalorder %s24, 0
      %p84 = por %p82, %p83
      %p85 = scmp.ne.s32.totalorder %s74, %s77
      %p86 = scmp.eq.s32.totalorder %s29, 1
      %p87 = por %p85, %p86
      %p88 = scmp.ne.s32.totalorder %s77, %s78
      %p89 = scmp.eq.s32.totalorder %s29, 0
      %p90 = por %p88, %p89
      %p91 = scmp.ne.s32.totalorder %s77, %s78
      %p92 = scmp.eq.s32.totalorder %s30, 1
      %p93 = por %p91, %p92
      %p95 = scmp.ne.s32.totalorder %s78, %s94
      %p96 = scmp.eq.s32.totalorder %s30, 0
      %p97 = por %p95, %p96
      %s98 = ssub.s32 %s31, %s43
      %p99 = scmp.eq.s32.totalorder %s98, 0
      %s101 = sadd.s32 %s100, 1
      %s102 = scalar_select %p99, %s100, %s101
      %p105 = pneg %p99
      %p106 = scmp.eq.s32.totalorder %s24, 1
      %p107 = por %p105, %p106
      %p108 = scmp.ne.s32.totalorder %s100, %s103
      %p109 = scmp.eq.s32.totalorder %s24, 0
      %p110 = por %p108, %p109
      %p111 = scmp.ne.s32.totalorder %s100, %s103
      %p112 = scmp.eq.s32.totalorder %s29, 1
      %p113 = por %p111, %p112
      %p114 = scmp.ne.s32.totalorder %s103, %s104
      %p115 = scmp.eq.s32.totalorder %s29, 0
      %p116 = por %p114, %p115
      %p117 = scmp.ne.s32.totalorder %s103, %s104
      %p118 = scmp.eq.s32.totalorder %s30, 1
      %p119 = por %p117, %p118
      %p121 = scmp.ne.s32.totalorder %s104, %s120
      %p122 = scmp.eq.s32.totalorder %s30, 0
      %p123 = por %p121, %p122
      %s124 = ssub.s32 %s31, %s43
      %s125 = ssub.s32 %s32, %s39
      %s126 = sor.u32 %s124, %s125
      %p127 = scmp.eq.s32.totalorder %s126, 0
      %s129 = sadd.s32 %s128, 1
      %s130 = scalar_select %p127, %s128, %s129
      %p133 = pneg %p127
      %p134 = scmp.eq.s32.totalorder %s24, 1
      %p135 = por %p133, %p134
      %p136 = scmp.ne.s32.totalorder %s128, %s131
      %p137 = scmp.eq.s32.totalorder %s24, 0
      %p138 = por %p136, %p137
      %p139 = scmp.ne.s32.totalorder %s128, %s131
      %p140 = scmp.eq.s32.totalorder %s29, 1
      %p141 = por %p139, %p140
      %p142 = scmp.ne.s32.totalorder %s131, %s132
      %p143 = scmp.eq.s32.totalorder %s29, 0
      %p144 = por %p142, %p143
      %p145 = scmp.ne.s32.totalorder %s131, %s132
      %p146 = scmp.eq.s32.totalorder %s30, 1
      %p147 = por %p145, %p146
      %p149 = scmp.ne.s32.totalorder %s132, %s148
      %p150 = scmp.eq.s32.totalorder %s30, 0
      %p151 = por %p149, %p150
      %s153 = sadd.s32 %s152, 1
      %p156 = scmp.eq.s32.totalorder %s24, 1
      %p157 = scmp.ne.s32.totalorder %s152, %s154
      %p158 = scmp.eq.s32.totalorder %s24, 0
      %p159 = por %p157, %p158
      %p160 = scmp.ne.s32.totalorder %s152, %s154
      %p161 = scmp.eq.s32.totalorder %s29, 1
      %p162 = por %p160, %p161
      %p163 = scmp.ne.s32.totalorder %s154, %s155
      %p164 = scmp.eq.s32.totalorder %s29, 0
      %p165 = por %p163, %p164
      %p166 = scmp.ne.s32.totalorder %s154, %s155
      %p167 = scmp.eq.s32.totalorder %s30, 1
      %p168 = por %p166, %p167
      %p170 = scmp.ne.s32.totalorder %s155, %s169
      %p171 = scmp.eq.s32.totalorder %s30, 0
      %p172 = por %p170, %p171
      %s174 = sadd.s32 %s173, 1
      %p177 = scmp.eq.s32.totalorder %s24, 1
      %p178 = scmp.ne.s32.totalorder %s173, %s175
      %p179 = scmp.eq.s32.totalorder %s24, 0
      %p180 = por %p178, %p179
      %p181 = scmp.ne.s32.totalorder %s173, %s175
      %p182 = scmp.eq.s32.totalorder %s29, 1
      %p183 = por %p181, %p182
      %p184 = scmp.ne.s32.totalorder %s175, %s176
      %p185 = scmp.eq.s32.totalorder %s29, 0
      %p186 = por %p184, %p185
      %p187 = scmp.ne.s32.totalorder %s175, %s176
      %p188 = scmp.eq.s32.totalorder %s30, 1
      %p189 = por %p187, %p188
      %p191 = scmp.ne.s32.totalorder %s176, %s190
      %p192 = scmp.eq.s32.totalorder %s30, 0
      %p193 = por %p191, %p192
      %s194 = ssub.s32 %s31, %s43
      %s195 = ssub.s32 %s32, %s39
      %s196 = sor.u32 %s194, %s195
      %p197 = scmp.eq.s32.totalorder %s196, 0
      %s199 = sadd.s32 %s198, 1
      %s200 = scalar_select %p197, %s198, %s199
      %p203 = pneg %p197
      %p204 = scmp.eq.s32.totalorder %s24, 1
      %p205 = por %p203, %p204
      %p206 = scmp.ne.s32.totalorder %s198, %s201
      %p207 = scmp.eq.s32.totalorder %s24, 0
      %p208 = por %p206, %p207
      %p209 = scmp.ne.s32.totalorder %s198, %s201
      %p210 = scmp.eq.s32.totalorder %s29, 1
      %p211 = por %p209, %p210
      %p212 = scmp.ne.s32.totalorder %s201, %s202
      %p213 = scmp.eq.s32.totalorder %s29, 0
      %p214 = por %p212, %p213
      %p215 = scmp.ne.s32.totalorder %s201, %s202
      %p216 = scmp.eq.s32.totalorder %s30, 1
      %p217 = por %p215, %p216
      %p219 = scmp.ne.s32.totalorder %s202, %s218
      %p220 = scmp.eq.s32.totalorder %s30, 0
      %p221 = por %p219, %p220
      %p222 = scmp.le.s32.totalorder 1, %s24
      %p223 = scmp.lt.s32.totalorder %s24, 3
      %p224 = pnand %p222, %p223
      %p225 = pneg %p224
      // Predicated region
      $region9: #{tpu_custom_call.1} parent=5 // pred_check
        _
      $region10: #{tpu_custom_call.1} parent=5 // pred_check_branch
        %227 = sbr.rel (%p224) target = $region12
      $region11: #{tpu_custom_call.1} parent=5 // pred_region
        %s228 = ssub.s32 %s24, 1
        // Predicated region
        $region13: #{tpu_custom_call.1} parent=11 // pred_check
          %p229 = pneg %p165
        $region14: #{tpu_custom_call.1} parent=11 // pred_check_branch
          %231 = sbr.rel (%p229) target = $region16
        $region15: #{tpu_custom_call.1} parent=11 // pred_region
          _
        $region16: #{tpu_custom_call.1} parent=11 // pred_fallthru
          _
        // Predicated region
        $region17: #{tpu_custom_call.1} parent=11 // pred_check
          %p232 = pneg %p186
        $region18: #{tpu_custom_call.1} parent=11 // pred_check_branch
          %234 = sbr.rel (%p232) target = $region20
        $region19: #{tpu_custom_call.1} parent=11 // pred_region
          _
        $region20: #{tpu_custom_call.1} parent=11 // pred_fallthru
          _
      $region12: #{tpu_custom_call.1} parent=5 // pred_fallthru
        _
      %p235 = scmp.lt.s32.totalorder %s24, 2
      // Predicated region
      $region21: #{tpu_custom_call.1} parent=5 // pred_check
        %p236 = pneg %p235
      $region22: #{tpu_custom_call.1} parent=5 // pred_check_branch
        %238 = sbr.rel (%p236) target = $region24
      $region23: #{tpu_custom_call.1} parent=5 // pred_region
        // Predicated region
        $region25: #{tpu_custom_call.1} parent=23 // pred_check
          %p239 = pneg %p58
        $region26: #{tpu_custom_call.1} parent=23 // pred_check_branch
          %241 = sbr.rel (%p239) target = $region28
        $region27: #{tpu_custom_call.1} parent=23 // pred_region
          %s242 = sand.u32 %s48, 1
          %s243 = scalar_lea.sflag [#allocation3], %s242
          %s244 = sand.u32 %s48, 1
          %s245 = smul.addr %s244, 4
          %s246 = scalar_lea.vmem [#allocation2], %s245
          %s247 = smul.u32 2, %s32
          %s249 = ssub.s32 64, 64
          %250 = vsyncadd %s243, %s249
          %s251 = smul.addr %s31, 2
          %s252 = sadd.s32 %s247, %s251
          %s253 = smul.addr %s252, 32
          %s254 = scalar_lea.hbm %s0, %s253
          %s256 = sshll.u32 %s246, 4
          %s257 = int_to_ptr.vmem [resolvable:$true] %s256
          %259 = dma.hbm_to_vmem [thread:$0]  %s254, 64, %s257, %s243
        $region28: #{tpu_custom_call.1} parent=23 // pred_fallthru
          _
        // Predicated region
        $region29: #{tpu_custom_call.1} parent=23 // pred_check
          %p260 = pneg %p84
        $region30: #{tpu_custom_call.1} parent=23 // pred_check_branch
          %262 = sbr.rel (%p260) target = $region32
        $region31: #{tpu_custom_call.1} parent=23 // pred_region
          %s263 = sand.u32 %s24, 1
          %s264 = scalar_lea.sflag [#allocation6], %s263
          %s265 = sand.u32 %s74, 1
          %s266 = smul.addr %s265, 4
          %s267 = scalar_lea.vmem [#allocation5], %s266
          %s269 = ssub.s32 64, 64
          %270 = vsyncadd %s264, %s269
          %s271 = smul.addr %s31, 2
          %s272 = smul.addr %s271, 32
          %s273 = scalar_lea.hbm %s1, %s272
          %s275 = sshll.u32 %s267, 4
          %s276 = int_to_ptr.vmem [resolvable:$true] %s275
          %278 = dma.hbm_to_vmem [thread:$0]  %s273, 64, %s276, %s264
        $region32: #{tpu_custom_call.1} parent=23 // pred_fallthru
          _
        // Predicated region
        $region33: #{tpu_custom_call.1} parent=23 // pred_check
          %p279 = pneg %p110
        $region34: #{tpu_custom_call.1} parent=23 // pred_check_branch
          %281 = sbr.rel (%p279) target = $region36
        $region35: #{tpu_custom_call.1} parent=23 // pred_region
          %s282 = sand.u32 %s24, 1
          %s283 = scalar_lea.sflag [#allocation6], %s282
          %s284 = sand.u32 %s100, 1
          %s285 = smul.addr %s284, 4
          %s286 = scalar_lea.vmem [#allocation7], %s285
          %s288 = ssub.s32 64, 64
          %289 = vsyncadd %s283, %s288
          %s290 = smul.addr %s31, 2
          %s291 = smul.addr %s290, 32
          %s292 = scalar_lea.hbm %s2, %s291
          %s294 = sshll.u32 %s286, 4
          %s295 = int_to_ptr.vmem [resolvable:$true] %s294
          %297 = dma.hbm_to_vmem [thread:$0]  %s292, 64, %s295, %s283
        $region36: #{tpu_custom_call.1} parent=23 // pred_fallthru
          _
        // Predicated region
        $region37: #{tpu_custom_call.1} parent=23 // pred_check
          %p298 = pneg %p138
        $region38: #{tpu_custom_call.1} parent=23 // pred_check_branch
          %300 = sbr.rel (%p298) target = $region40
        $region39: #{tpu_custom_call.1} parent=23 // pred_region
          %s301 = sand.u32 %s128, 1
          %s302 = scalar_lea.sflag [#allocation9], %s301
          %s303 = sand.u32 %s128, 1
          %s304 = smul.addr %s303, 8
          %s305 = scalar_lea.vmem [#allocation8], %s304
          %s306 = smul.u32 2, %s32
          %s308 = ssub.s32 128, 128
          %309 = vsyncadd %s302, %s308
          %s310 = smul.addr %s31, 2
          %s311 = sadd.s32 %s306, %s310
          %s312 = smul.addr %s311, 64
          %s313 = scalar_lea.hbm %s3, %s312
          %s315 = sshll.u32 %s305, 4
          %s316 = int_to_ptr.vmem [resolvable:$true] %s315
          %318 = dma.hbm_to_vmem [thread:$0]  %s313, 128, %s316, %s302
        $region40: #{tpu_custom_call.1} parent=23 // pred_fallthru
          _
      $region24: #{tpu_custom_call.1} parent=5 // pred_fallthru
        _
      %p319 = scmp.le.s32.totalorder 1, %s24
      %p320 = scmp.lt.s32.totalorder %s24, 3
      %p321 = pnand %p319, %p320
      %p322 = pneg %p321
      // Predicated region
      $region41: #{tpu_custom_call.1} parent=5 // pred_check
        _
      $region42: #{tpu_custom_call.1} parent=5 // pred_check_branch
        %324 = sbr.rel (%p321) target = $region44
      $region43: #{tpu_custom_call.1} parent=5 // pred_region
        %s325 = ssub.s32 %s24, 1
        %s326 = sand.u32 %s51, 1
        %s327 = scalar_lea.sflag [#allocation3], %s326
        %s328 = sand.u32 %s51, 1
        %s329 = smul.addr %s328, 4
        %s330 = scalar_lea.vmem [#allocation2], %s329
        // Predicated region
        $region45: #{tpu_custom_call.1} parent=43 // pred_check
          %p331 = pneg %p64
        $region46: #{tpu_custom_call.1} parent=43 // pred_check_branch
          %333 = sbr.rel (%p331) target = $region48
        $region47: #{tpu_custom_call.1} parent=43 // pred_region
          %334 = dma.done %s327, 64
        $region48: #{tpu_custom_call.1} parent=43 // pred_fallthru
          _
        %s335 = sand.u32 %s29, 1
        %s336 = scalar_lea.sflag [#allocation6], %s335
        %s337 = sand.u32 %s77, 1
        %s338 = smul.addr %s337, 4
        %s339 = scalar_lea.vmem [#allocation5], %s338
        // Predicated region
        $region49: #{tpu_custom_call.1} parent=43 // pred_check
          %p340 = pneg %p90
        $region50: #{tpu_custom_call.1} parent=43 // pred_check_branch
          %342 = sbr.rel (%p340) target = $region52
        $region51: #{tpu_custom_call.1} parent=43 // pred_region
          %343 = dma.done %s336, 64
        $region52: #{tpu_custom_call.1} parent=43 // pred_fallthru
          _
        %s344 = sand.u32 %s29, 1
        %s345 = scalar_lea.sflag [#allocation6], %s344
        %s346 = sand.u32 %s103, 1
        %s347 = smul.addr %s346, 4
        %s348 = scalar_lea.vmem [#allocation7], %s347
        // Predicated region
        $region53: #{tpu_custom_call.1} parent=43 // pred_check
          %p349 = pneg %p116
        $region54: #{tpu_custom_call.1} parent=43 // pred_check_branch
          %351 = sbr.rel (%p349) target = $region56
        $region55: #{tpu_custom_call.1} parent=43 // pred_region
          %352 = dma.done %s345, 64
        $region56: #{tpu_custom_call.1} parent=43 // pred_fallthru
          _
        %s353 = sand.u32 %s131, 1
        %s354 = scalar_lea.sflag [#allocation9], %s353
        %s355 = sand.u32 %s131, 1
        %s356 = smul.addr %s355, 8
        %s357 = scalar_lea.vmem [#allocation8], %s356
        // Predicated region
        $region57: #{tpu_custom_call.1} parent=43 // pred_check
          %p358 = pneg %p144
        $region58: #{tpu_custom_call.1} parent=43 // pred_check_branch
          %360 = sbr.rel (%p358) target = $region60
        $region59: #{tpu_custom_call.1} parent=43 // pred_region
          %361 = dma.done %s354, 128
        $region60: #{tpu_custom_call.1} parent=43 // pred_fallthru
          _
        %s362 = sand.u32 %s51, 1
        %s363 = scalar_lea.sflag [#allocation3], %s362
        %s364 = sand.u32 %s51, 1
        %s365 = smul.addr %s364, 4
        %s366 = scalar_lea.vmem [#allocation2], %s365
        %p367 = pneg %p64
        %p368 = pneg %p61
        %s369 = sand.u32 %s29, 1
        %s370 = scalar_lea.sflag [#allocation6], %s369
        %s371 = sand.u32 %s77, 1
        %s372 = smul.addr %s371, 4
        %s373 = scalar_lea.vmem [#allocation5], %s372
        %p374 = pneg %p90
        %p375 = pneg %p87
        %s376 = sand.u32 %s29, 1
        %s377 = scalar_lea.sflag [#allocation6], %s376
        %s378 = sand.u32 %s103, 1
        %s379 = smul.addr %s378, 4
        %s380 = scalar_lea.vmem [#allocation7], %s379
        %p381 = pneg %p116
        %p382 = pneg %p113
        %s383 = sand.u32 %s131, 1
        %s384 = scalar_lea.sflag [#allocation9], %s383
        %s385 = sand.u32 %s131, 1
        %s386 = smul.addr %s385, 8
        %s387 = scalar_lea.vmem [#allocation8], %s386
        %p388 = pneg %p144
        %p389 = pneg %p141
        %p390 = pneg %p165
        %p391 = pneg %p162
        %p392 = pneg %p186
        %p393 = pneg %p183
        %p394 = pneg %p214
        %p395 = pneg %p211
        %s396 = sand.u32 %s201, 1
        %s397 = scalar_lea.sflag [#allocation4], %s396
        %s398 = sand.u32 %s201, 1
        %s399 = smul.addr %s398, 8
        %s400 = scalar_lea.vmem [#allocation10], %s399
        %s401 = smul.u32 2, %s34
        %s402 = smul.u32 2, %s34
        %s403 = smul.u32 2, %s34
        %v405 = vld [vmem:[%s339] sm:$0xf]
        %v406 = vld [vmem:[%s330] sm:$0xf]
        %v409 = vunpack.c.l.s4 1983009808
        %v410 = vunpack.c.0.s8 %v409
        %v411 = vlaneseq
        %v412 = vshrl.u32 %v411, 7
        %v413 = vsub.s32 %v410, %v412
        %v414 = vrot.slane %v405, %v413
        %v415 = vcombine.high %v414, %v414
        %418 = vxpose.xlu0.c.b16.start [1/8] %v414, 128
        %419 = vxpose.xlu0.c.b16.cont [2/8] 0, 128
        %420 = vxpose.xlu0.c.b16.cont [3/8] 0, 128
        %421 = vxpose.xlu0.c.b16.cont [4/8] 0, 128
        %422 = vxpose.xlu0.c.b16.cont [5/8] 0, 128
        %423 = vxpose.xlu0.c.b16.cont [6/8] 0, 128
        %424 = vxpose.xlu0.c.b16.cont [7/8] 0, 128
        %425 = vxpose.xlu0.c.b16.end [8/8] 0, 128
        %v426 = vpop.trf.xlu0
        %v427 = vpop.trf.xlu0
        %v428 = vpop.trf.xlu0
        %v429 = vpop.trf.xlu0
        %v430 = vpop.trf.xlu0
        %v431 = vpop.trf.xlu0
        %v432 = vpop.trf.xlu0
        %v433 = vpop.trf.xlu0
        %434 = vxpose.xlu0.c.b16.start [1/8] %v415, 128
        %435 = vxpose.xlu0.c.b16.cont [2/8] 0, 128
        %436 = vxpose.xlu0.c.b16.cont [3/8] 0, 128
        %437 = vxpose.xlu0.c.b16.cont [4/8] 0, 128
        %438 = vxpose.xlu0.c.b16.cont [5/8] 0, 128
        %439 = vxpose.xlu0.c.b16.cont [6/8] 0, 128
        %440 = vxpose.xlu0.c.b16.cont [7/8] 0, 128
        %441 = vxpose.xlu0.c.b16.end [8/8] 0, 128
        %v442 = vpop.trf.xlu0
        %v443 = vpop.trf.xlu0
        %v444 = vpop.trf.xlu0
        %v445 = vpop.trf.xlu0
        %v446 = vpop.trf.xlu0
        %v447 = vpop.trf.xlu0
        %v448 = vpop.trf.xlu0
        %v449 = vpop.trf.xlu0
        %v452 = vunpack.c.l.s4 1983009808
        %v453 = vunpack.c.0.s8 %v452
        %v454 = vlaneseq
        %v455 = vshrl.u32 %v454, 7
        %v456 = vsub.s32 %v453, %v455
        %v457 = vrot.slane %v406, %v456
        %v458 = vcombine.high %v457, %v457
        %vm459 = vcmask 31744
        %v461 = vsel %vm459, %v426, 0
        %v464 = vsel %vm459, %v427, 0
        %v467 = vsel %vm459, %v428, 0
        %v470 = vsel %vm459, %v429, 0
        %v473 = vsel %vm459, %v430, 0
        %v476 = vsel %vm459, %v431, 0
        %v479 = vsel %vm459, %v432, 0
        %v482 = vsel %vm459, %v433, 0
        %v485 = vsel %vm459, %v442, 0
        %v488 = vsel %vm459, %v443, 0
        %v491 = vsel %vm459, %v444, 0
        %v494 = vsel %vm459, %v445, 0
        %v497 = vsel %vm459, %v446, 0
        %v500 = vsel %vm459, %v447, 0
        %v503 = vsel %vm459, %v448, 0
        %v506 = vsel %vm459, %v449, 0
        %vm508 = vcmask 1041408
        %v510 = vsel %vm508, %v457, 0
        %v513 = vsel %vm508, %v458, 0
        %515 = vmatprep.subr.bf16.mxu0 %v513
        %516 = vmatpush1.bf16.msra.mxu0 %v510
        %517 = vmatprep.subr.bf16.mxu0 0
        %518 = vmatpush1.bf16.msra.mxu0 0
        %519 = vmatprep.subr.bf16.mxu0 0
        %520 = vmatpush1.bf16.msra.mxu0 0
        %521 = vmatprep.subr.bf16.mxu0 0
        %522 = vmatpush1.bf16.msra.mxu0 0
        %523 = vmatprep.subr.bf16.mxu0 0
        %524 = vmatpush1.bf16.msra.mxu0 0
        %525 = vmatprep.subr.bf16.mxu0 0
        %526 = vmatpush1.bf16.msra.mxu0 0
        %527 = vmatprep.subr.bf16.mxu0 0
        %528 = vmatpush1.bf16.msra.mxu0 0
        %529 = vmatprep.subr.bf16.mxu0 0
        %530 = vmatpush1.bf16.msra.mxu0 0
        %531 = vmatprep.subr.bf16.mxu0 0
        %532 = vmatpush1.bf16.msra.mxu0 0
        %533 = vmatprep.subr.bf16.mxu0 0
        %534 = vmatpush1.bf16.msra.mxu0 0
        %535 = vmatprep.subr.bf16.mxu0 0
        %536 = vmatpush1.bf16.msra.mxu0 0
        %537 = vmatprep.subr.bf16.mxu0 0
        %538 = vmatpush1.bf16.msra.mxu0 0
        %539 = vmatprep.subr.bf16.mxu0 0
        %540 = vmatpush1.bf16.msra.mxu0 0
        %541 = vmatprep.subr.bf16.mxu0 0
        %542 = vmatpush1.bf16.msra.mxu0 0
        %543 = vmatprep.subr.bf16.mxu0 0
        %544 = vmatpush1.bf16.msra.mxu0 0
        %545 = vmatprep.subr.bf16.mxu0 0
        %546 = vmatpush1.bf16.msra.mxu0 0
        %547 = vmatprep.mubr.bf16.mxu0 0
        %548 = vmatmul.mubr.bf16.gmra.mrb[0].mxu0 %v461
        %v549 = vpop.f32.mrb[0].mxu0
        %v550 = vadd.f32 0.0, %v549
        %v551 = vpop.f32.mrb[0].mxu0
        %v552 = vadd.f32 0.0, %v551
        %v553 = vpop.f32.mrb[0].mxu0
        %v554 = vadd.f32 0.0, %v553
        %v555 = vpop.f32.mrb[0].mxu0
        %v556 = vadd.f32 0.0, %v555
        %557 = vmatprep.mubr.bf16.mxu0 0
        %558 = vmatmul.mubr.bf16.gmra.mrb[0].mxu0 %v464
        %v559 = vpop.f32.mrb[0].mxu0
        %v560 = vadd.f32 0.0, %v559
        %v561 = vpop.f32.mrb[0].mxu0
        %v562 = vadd.f32 0.0, %v561
        %v563 = vpop.f32.mrb[0].mxu0
        %v564 = vadd.f32 0.0, %v563
        %v565 = vpop.f32.mrb[0].mxu0
        %v566 = vadd.f32 0.0, %v565
        %567 = vmatprep.mubr.bf16.mxu0 0
        %568 = vmatmul.mubr.bf16.gmra.mrb[0].mxu0 %v467
        %v569 = vpop.f32.mrb[0].mxu0
        %v570 = vadd.f32 0.0, %v569
        %v571 = vpop.f32.mrb[0].mxu0
        %v572 = vadd.f32 0.0, %v571
        %v573 = vpop.f32.mrb[0].mxu0
        %v574 = vadd.f32 0.0, %v573
        %v575 = vpop.f32.mrb[0].mxu0
        %v576 = vadd.f32 0.0, %v575
        %577 = vmatprep.mubr.bf16.mxu0 0
        %578 = vmatmul.mubr.bf16.gmra.mrb[0].mxu0 %v470
        %v579 = vpop.f32.mrb[0].mxu0
        %v580 = vadd.f32 0.0, %v579
        %v581 = vpop.f32.mrb[0].mxu0
        %v582 = vadd.f32 0.0, %v581
        %v583 = vpop.f32.mrb[0].mxu0
        %v584 = vadd.f32 0.0, %v583
        %v585 = vpop.f32.mrb[0].mxu0
        %v586 = vadd.f32 0.0, %v585
        %587 = vmatprep.mubr.bf16.mxu0 0
        %588 = vmatmul.mubr.bf16.gmra.mrb[0].mxu0 %v473
        %v589 = vpop.f32.mrb[0].mxu0
        %v590 = vadd.f32 0.0, %v589
        %v591 = vpop.f32.mrb[0].mxu0
        %v592 = vadd.f32 0.0, %v591
        %v593 = vpop.f32.mrb[0].mxu0
        %v594 = vadd.f32 0.0, %v593
        %v595 = vpop.f32.mrb[0].mxu0
        %v596 = vadd.f32 0.0, %v595
        %597 = vmatprep.mubr.bf16.mxu0 0
        %598 = vmatmul.mubr.bf16.gmra.mrb[0].mxu0 %v476
        %v599 = vpop.f32.mrb[0].mxu0
        %v600 = vadd.f32 0.0, %v599
        %v601 = vpop.f32.mrb[0].mxu0
        %v602 = vadd.f32 0.0, %v601
        %v603 = vpop.f32.mrb[0].mxu0
        %v604 = vadd.f32 0.0, %v603
        %v605 = vpop.f32.mrb[0].mxu0
        %v606 = vadd.f32 0.0, %v605
        %607 = vmatprep.mubr.bf16.mxu0 0
        %608 = vmatmul.mubr.bf16.gmra.mrb[0].mxu0 %v479
        %v609 = vpop.f32.mrb[0].mxu0
        %v610 = vadd.f32 0.0, %v609
        %v611 = vpop.f32.mrb[0].mxu0
        %v612 = vadd.f32 0.0, %v611
        %v613 = vpop.f32.mrb[0].mxu0
        %v614 = vadd.f32 0.0, %v613
        %v615 = vpop.f32.mrb[0].mxu0
        %v616 = vadd.f32 0.0, %v615
        %617 = vmatprep.mubr.bf16.mxu0 0
        %618 = vmatmul.mubr.bf16.gmra.mrb[0].mxu0 %v482
        %v619 = vpop.f32.mrb[0].mxu0
        %v620 = vadd.f32 0.0, %v619
        %v621 = vpop.f32.mrb[0].mxu0
        %v622 = vadd.f32 0.0, %v621
        %v623 = vpop.f32.mrb[0].mxu0
        %v624 = vadd.f32 0.0, %v623
        %v625 = vpop.f32.mrb[0].mxu0
        %v626 = vadd.f32 0.0, %v625
        %627 = vmatprep.mubr.bf16.mxu0 0
        %628 = vmatmul.mubr.bf16.gmra.mrb[0].mxu0 %v485
        %v629 = vpop.f32.mrb[0].mxu0
        %v630 = vadd.f32 0.0, %v629
        %v631 = vpop.f32.mrb[0].mxu0
        %v632 = vadd.f32 0.0, %v631
        %v633 = vpop.f32.mrb[0].mxu0
        %v634 = vadd.f32 0.0, %v633
        %v635 = vpop.f32.mrb[0].mxu0
        %v636 = vadd.f32 0.0, %v635
        %637 = vmatprep.mubr.bf16.mxu0 0
        %638 = vmatmul.mubr.bf16.gmra.mrb[0].mxu0 %v488
        %v639 = vpop.f32.mrb[0].mxu0
        %v640 = vadd.f32 0.0, %v639
        %v641 = vpop.f32.mrb[0].mxu0
        %v642 = vadd.f32 0.0, %v641
        %v643 = vpop.f32.mrb[0].mxu0
        %v644 = vadd.f32 0.0, %v643
        %v645 = vpop.f32.mrb[0].mxu0
        %v646 = vadd.f32 0.0, %v645
        %647 = vmatprep.mubr.bf16.mxu0 0
        %648 = vmatmul.mubr.bf16.gmra.mrb[0].mxu0 %v491
        %v649 = vpop.f32.mrb[0].mxu0
        %v650 = vadd.f32 0.0, %v649
        %v651 = vpop.f32.mrb[0].mxu0
        %v652 = vadd.f32 0.0, %v651
        %v653 = vpop.f32.mrb[0].mxu0
        %v654 = vadd.f32 0.0, %v653
        %v655 = vpop.f32.mrb[0].mxu0
        %v656 = vadd.f32 0.0, %v655
        %657 = vmatprep.mubr.bf16.mxu0 0
        %658 = vmatmul.mubr.bf16.gmra.mrb[0].mxu0 %v494
        %v659 = vpop.f32.mrb[0].mxu0
        %v660 = vadd.f32 0.0, %v659
        %v661 = vpop.f32.mrb[0].mxu0
        %v662 = vadd.f32 0.0, %v661
        %v663 = vpop.f32.mrb[0].mxu0
        %v664 = vadd.f32 0.0, %v663
        %v665 = vpop.f32.mrb[0].mxu0
        %v666 = vadd.f32 0.0, %v665
        %667 = vmatprep.mubr.bf16.mxu0 0
        %668 = vmatmul.mubr.bf16.gmra.mrb[0].mxu0 %v497
        %v669 = vpop.f32.mrb[0].mxu0
        %v670 = vadd.f32 0.0, %v669
        %v671 = vpop.f32.mrb[0].mxu0
        %v672 = vadd.f32 0.0, %v671
        %v673 = vpop.f32.mrb[0].mxu0
        %v674 = vadd.f32 0.0, %v673
        %v675 = vpop.f32.mrb[0].mxu0
        %v676 = vadd.f32 0.0, %v675
        %677 = vmatprep.mubr.bf16.mxu0 0
        %678 = vmatmul.mubr.bf16.gmra.mrb[0].mxu0 %v500
        %v679 = vpop.f32.mrb[0].mxu0
        %v680 = vadd.f32 0.0, %v679
        %v681 = vpop.f32.mrb[0].mxu0
        %v682 = vadd.f32 0.0, %v681
        %v683 = vpop.f32.mrb[0].mxu0
        %v684 = vadd.f32 0.0, %v683
        %v685 = vpop.f32.mrb[0].mxu0
        %v686 = vadd.f32 0.0, %v685
        %687 = vmatprep.mubr.bf16.mxu0 0
        %688 = vmatmul.mubr.bf16.gmra.mrb[0].mxu0 %v503
        %v689 = vpop.f32.mrb[0].mxu0
        %v690 = vadd.f32 0.0, %v689
        %v691 = vpop.f32.mrb[0].mxu0
        %v692 = vadd.f32 0.0, %v691
        %v693 = vpop.f32.mrb[0].mxu0
        %v694 = vadd.f32 0.0, %v693
        %v695 = vpop.f32.mrb[0].mxu0
        %v696 = vadd.f32 0.0, %v695
        %697 = vmatprep.mubr.bf16.mxu0 0
        %698 = vmatmul.mubr.bf16.gmra.mrb[0].mxu0 %v506
        %v699 = vpop.f32.mrb[0].mxu0
        %v700 = vadd.f32 0.0, %v699
        %v701 = vpop.f32.mrb[0].mxu0
        %v702 = vadd.f32 0.0, %v701
        %v703 = vpop.f32.mrb[0].mxu0
        %v704 = vadd.f32 0.0, %v703
        %v705 = vpop.f32.mrb[0].mxu0
        %v706 = vadd.f32 0.0, %v705
        %707 = vdwg.mxu0
        %v708 = vmax.f32 %v550, %v560
        %v709 = vmax.f32 %v554, %v564
        %v710 = vmax.f32 %v708, %v570
        %v711 = vmax.f32 %v709, %v574
        %v712 = vmax.f32 %v710, %v580
        %v713 = vmax.f32 %v711, %v584
        %v714 = vmax.f32 %v712, %v590
        %v715 = vmax.f32 %v713, %v594
        %v716 = vmax.f32 %v714, %v600
        %v717 = vmax.f32 %v715, %v604
        %v718 = vmax.f32 %v716, %v610
        %v719 = vmax.f32 %v717, %v614
        %v720 = vmax.f32 %v718, %v620
        %v721 = vmax.f32 %v719, %v624
        %v722 = vmax.f32 %v720, %v630
        %v723 = vmax.f32 %v721, %v634
        %v724 = vmax.f32 %v722, %v640
        %v725 = vmax.f32 %v723, %v644
        %v726 = vmax.f32 %v724, %v650
        %v727 = vmax.f32 %v725, %v654
        %v728 = vmax.f32 %v726, %v660
        %v729 = vmax.f32 %v727, %v664
        %v730 = vmax.f32 %v728, %v670
        %v731 = vmax.f32 %v729, %v674
        %v732 = vmax.f32 %v730, %v680
        %v733 = vmax.f32 %v731, %v684
        %v734 = vmax.f32 %v732, %v690
        %v735 = vmax.f32 %v733, %v694
        %v736 = vmax.f32 %v734, %v700
        %v737 = vmax.f32 %v735, %v704
        %v738 = vmax.f32 %v736, %v737
        %v739 = vrot.slane %v738, 4
        %v740 = vmax.f32 %v738, %v739
        %v741 = vrot.slane %v740, 2
        %v742 = vmax.f32 %v740, %v741
        %v743 = vrot.slane %v742, 1
        %v744 = vmax.f32 %v742, %v743
        %v745 = vmax.f32 %v552, %v562
        %v746 = vmax.f32 %v556, %v566
        %v747 = vmax.f32 %v745, %v572
        %v748 = vmax.f32 %v746, %v576
        %v749 = vmax.f32 %v747, %v582
        %v750 = vmax.f32 %v748, %v586
        %v751 = vmax.f32 %v749, %v592
        %v752 = vmax.f32 %v750, %v596
        %v753 = vmax.f32 %v751, %v602
        %v754 = vmax.f32 %v752, %v606
        %v755 = vmax.f32 %v753, %v612
        %v756 = vmax.f32 %v754, %v616
        %v757 = vmax.f32 %v755, %v622
        %v758 = vmax.f32 %v756, %v626
        %v759 = vmax.f32 %v757, %v632
        %v760 = vmax.f32 %v758, %v636
        %v761 = vmax.f32 %v759, %v642
        %v762 = vmax.f32 %v760, %v646
        %v763 = vmax.f32 %v761, %v652
        %v764 = vmax.f32 %v762, %v656
        %v765 = vmax.f32 %v763, %v662
        %v766 = vmax.f32 %v764, %v666
        %v767 = vmax.f32 %v765, %v672
        %v768 = vmax.f32 %v766, %v676
        %v769 = vmax.f32 %v767, %v682
        %v770 = vmax.f32 %v768, %v686
        %v771 = vmax.f32 %v769, %v692
        %v772 = vmax.f32 %v770, %v696
        %v773 = vmax.f32 %v771, %v702
        %v774 = vmax.f32 %v772, %v706
        %v775 = vmax.f32 %v773, %v774
        %v776 = vrot.slane %v775, 4
        %v777 = vmax.f32 %v775, %v776
        %v778 = vrot.slane %v777, 2
        %v779 = vmax.f32 %v777, %v778
        %v780 = vrot.slane %v779, 1
        %v781 = vmax.f32 %v779, %v780
        %v782 = vsub.f32 %v550, %v744
        %v783 = vsub.f32 %v552, %v781
        %v784 = vsub.f32 %v554, %v744
        %v785 = vsub.f32 %v556, %v781
        %v786 = vsub.f32 %v560, %v744
        %v787 = vsub.f32 %v562, %v781
        %v788 = vsub.f32 %v564, %v744
        %v789 = vsub.f32 %v566, %v781
        %v790 = vsub.f32 %v570, %v744
        %v791 = vsub.f32 %v572, %v781
        %v792 = vsub.f32 %v574, %v744
        %v793 = vsub.f32 %v576, %v781
        %v794 = vsub.f32 %v580, %v744
        %v795 = vsub.f32 %v582, %v781
        %v796 = vsub.f32 %v584, %v744
        %v797 = vsub.f32 %v586, %v781
        %v798 = vsub.f32 %v590, %v744
        %v799 = vsub.f32 %v592, %v781
        %v800 = vsub.f32 %v594, %v744
        %v801 = vsub.f32 %v596, %v781
        %v802 = vsub.f32 %v600, %v744
        %v803 = vsub.f32 %v602, %v781
        %v804 = vsub.f32 %v604, %v744
        %v805 = vsub.f32 %v606, %v781
        %v806 = vsub.f32 %v610, %v744
        %v807 = vsub.f32 %v612, %v781
        %v808 = vsub.f32 %v614, %v744
        %v809 = vsub.f32 %v616, %v781
        %v810 = vsub.f32 %v620, %v744
        %v811 = vsub.f32 %v622, %v781
        %v812 = vsub.f32 %v624, %v744
        %v813 = vsub.f32 %v626, %v781
        %v814 = vsub.f32 %v630, %v744
        %v815 = vsub.f32 %v632, %v781
        %v816 = vsub.f32 %v634, %v744
        %v817 = vsub.f32 %v636, %v781
        %v818 = vsub.f32 %v640, %v744
        %v819 = vsub.f32 %v642, %v781
        %v820 = vsub.f32 %v644, %v744
        %v821 = vsub.f32 %v646, %v781
        %v822 = vsub.f32 %v650, %v744
        %v823 = vsub.f32 %v652, %v781
        %v824 = vsub.f32 %v654, %v744
        %v825 = vsub.f32 %v656, %v781
        %v826 = vsub.f32 %v660, %v744
        %v827 = vsub.f32 %v662, %v781
        %v828 = vsub.f32 %v664, %v744
        %v829 = vsub.f32 %v666, %v781
        %v830 = vsub.f32 %v670, %v744
        %v831 = vsub.f32 %v672, %v781
        %v832 = vsub.f32 %v674, %v744
        %v833 = vsub.f32 %v676, %v781
        %v834 = vsub.f32 %v680, %v744
        %v835 = vsub.f32 %v682, %v781
        %v836 = vsub.f32 %v684, %v744
        %v837 = vsub.f32 %v686, %v781
        %v838 = vsub.f32 %v690, %v744
        %v839 = vsub.f32 %v692, %v781
        %v840 = vsub.f32 %v694, %v744
        %v841 = vsub.f32 %v696, %v781
        %v842 = vsub.f32 %v700, %v744
        %v843 = vsub.f32 %v702, %v781
        %v844 = vsub.f32 %v704, %v744
        %v845 = vsub.f32 %v706, %v781
        %v846 = vmul.f32 %v782, 1.442695
        %v847 = vpow.pop %v846
        %v848 = vmul.f32 %v783, 1.442695
        %v849 = vpow.pop %v848
        %v850 = vmul.f32 %v784, 1.442695
        %v851 = vpow.pop %v850
        %v852 = vmul.f32 %v785, 1.442695
        %v853 = vpow.pop %v852
        %v854 = vmul.f32 %v786, 1.442695
        %v855 = vpow.pop %v854
        %v856 = vmul.f32 %v787, 1.442695
        %v857 = vpow.pop %v856
        %v858 = vmul.f32 %v788, 1.442695
        %v859 = vpow.pop %v858
        %v860 = vmul.f32 %v789, 1.442695
        %v861 = vpow.pop %v860
        %v862 = vmul.f32 %v790, 1.442695
        %v863 = vpow.pop %v862
        %v864 = vmul.f32 %v791, 1.442695
        %v865 = vpow.pop %v864
        %v866 = vmul.f32 %v792, 1.442695
        %v867 = vpow.pop %v866
        %v868 = vmul.f32 %v793, 1.442695
        %v869 = vpow.pop %v868
        %v870 = vmul.f32 %v794, 1.442695
        %v871 = vpow.pop %v870
        %v872 = vmul.f32 %v795, 1.442695
        %v873 = vpow.pop %v872
        %v874 = vmul.f32 %v796, 1.442695
        %v875 = vpow.pop %v874
        %v876 = vmul.f32 %v797, 1.442695
        %v877 = vpow.pop %v876
        %v878 = vmul.f32 %v798, 1.442695
        %v879 = vpow.pop %v878
        %v880 = vmul.f32 %v799, 1.442695
        %v881 = vpow.pop %v880
        %v882 = vmul.f32 %v800, 1.442695
        %v883 = vpow.pop %v882
        %v884 = vmul.f32 %v801, 1.442695
        %v885 = vpow.pop %v884
        %v886 = vmul.f32 %v802, 1.442695
        %v887 = vpow.pop %v886
        %v888 = vmul.f32 %v803, 1.442695
        %v889 = vpow.pop %v888
        %v890 = vmul.f32 %v804, 1.442695
        %v891 = vpow.pop %v890
        %v892 = vmul.f32 %v805, 1.442695
        %v893 = vpow.pop %v892
        %v894 = vmul.f32 %v806, 1.442695
        %v895 = vpow.pop %v894
        %v896 = vmul.f32 %v807, 1.442695
        %v897 = vpow.pop %v896
        %v898 = vmul.f32 %v808, 1.442695
        %v899 = vpow.pop %v898
        %v900 = vmul.f32 %v809, 1.442695
        %v901 = vpow.pop %v900
        %v902 = vmul.f32 %v810, 1.442695
        %v903 = vpow.pop %v902
        %v904 = vmul.f32 %v811, 1.442695
        %v905 = vpow.pop %v904
        %v906 = vmul.f32 %v812, 1.442695
        %v907 = vpow.pop %v906
        %v908 = vmul.f32 %v813, 1.442695
        %v909 = vpow.pop %v908
        %v910 = vmul.f32 %v814, 1.442695
        %v911 = vpow.pop %v910
        %v912 = vmul.f32 %v815, 1.442695
        %v913 = vpow.pop %v912
        %v914 = vmul.f32 %v816, 1.442695
        %v915 = vpow.pop %v914
        %v916 = vmul.f32 %v817, 1.442695
        %v917 = vpow.pop %v916
        %v918 = vmul.f32 %v818, 1.442695
        %v919 = vpow.pop %v918
        %v920 = vmul.f32 %v819, 1.442695
        %v921 = vpow.pop %v920
        %v922 = vmul.f32 %v820, 1.442695
        %v923 = vpow.pop %v922
        %v924 = vmul.f32 %v821, 1.442695
        %v925 = vpow.pop %v924
        %v926 = vmul.f32 %v822, 1.442695
        %v927 = vpow.pop %v926
        %v928 = vmul.f32 %v823, 1.442695
        %v929 = vpow.pop %v928
        %v930 = vmul.f32 %v824, 1.442695
        %v931 = vpow.pop %v930
        %v932 = vmul.f32 %v825, 1.442695
        %v933 = vpow.pop %v932
        %v934 = vmul.f32 %v826, 1.442695
        %v935 = vpow.pop %v934
        %v936 = vmul.f32 %v827, 1.442695
        %v937 = vpow.pop %v936
        %v938 = vmul.f32 %v828, 1.442695
        %v939 = vpow.pop %v938
        %v940 = vmul.f32 %v829, 1.442695
        %v941 = vpow.pop %v940
        %v942 = vmul.f32 %v830, 1.442695
        %v943 = vpow.pop %v942
        %v944 = vmul.f32 %v831, 1.442695
        %v945 = vpow.pop %v944
        %v946 = vmul.f32 %v832, 1.442695
        %v947 = vpow.pop %v946
        %v948 = vmul.f32 %v833, 1.442695
        %v949 = vpow.pop %v948
        %v950 = vmul.f32 %v834, 1.442695
        %v951 = vpow.pop %v950
        %v952 = vmul.f32 %v835, 1.442695
        %v953 = vpow.pop %v952
        %v954 = vmul.f32 %v836, 1.442695
        %v955 = vpow.pop %v954
        %v956 = vmul.f32 %v837, 1.442695
        %v957 = vpow.pop %v956
        %v958 = vmul.f32 %v838, 1.442695
        %v959 = vpow.pop %v958
        %v960 = vmul.f32 %v839, 1.442695
        %v961 = vpow.pop %v960
        %v962 = vmul.f32 %v840, 1.442695
        %v963 = vpow.pop %v962
        %v964 = vmul.f32 %v841, 1.442695
        %v965 = vpow.pop %v964
        %v966 = vmul.f32 %v842, 1.442695
        %v967 = vpow.pop %v966
        %v968 = vmul.f32 %v843, 1.442695
        %v969 = vpow.pop %v968
        %v970 = vmul.f32 %v844, 1.442695
        %v971 = vpow.pop %v970
        %v972 = vmul.f32 %v845, 1.442695
        %v973 = vpow.pop %v972
        %v974 = vadd.f32 %v847, %v851
        %v975 = vadd.f32 %v974, %v855
        %v976 = vadd.f32 %v975, %v859
        %v977 = vadd.f32 %v976, %v863
        %v978 = vadd.f32 %v977, %v867
        %v979 = vadd.f32 %v978, %v871
        %v980 = vadd.f32 %v979, %v875
        %v981 = vadd.f32 %v980, %v879
        %v982 = vadd.f32 %v981, %v883
        %v983 = vadd.f32 %v982, %v887
        %v984 = vadd.f32 %v983, %v891
        %v985 = vadd.f32 %v984, %v895
        %v986 = vadd.f32 %v985, %v899
        %v987 = vadd.f32 %v986, %v903
        %v988 = vadd.f32 %v987, %v907
        %v989 = vadd.f32 %v988, %v911
        %v990 = vadd.f32 %v989, %v915
        %v991 = vadd.f32 %v990, %v919
        %v992 = vadd.f32 %v991, %v923
        %v993 = vadd.f32 %v992, %v927
        %v994 = vadd.f32 %v993, %v931
        %v995 = vadd.f32 %v994, %v935
        %v996 = vadd.f32 %v995, %v939
        %v997 = vadd.f32 %v996, %v943
        %v998 = vadd.f32 %v997, %v947
        %v999 = vadd.f32 %v998, %v951
        %v1000 = vadd.f32 %v999, %v955
        %v1001 = vadd.f32 %v1000, %v959
        %v1002 = vadd.f32 %v1001, %v963
        %v1003 = vadd.f32 %v1002, %v967
        %v1004 = vadd.f32 %v1003, %v971
        %v1005 = vrot.slane %v1004, 4
        %v1006 = vadd.f32 %v1004, %v1005
        %v1007 = vrot.slane %v1006, 2
        %v1008 = vadd.f32 %v1006, %v1007
        %v1009 = vrot.slane %v1008, 1
        %v1010 = vadd.f32 %v1008, %v1009
        %v1011 = vadd.f32 %v849, %v853
        %v1012 = vadd.f32 %v1011, %v857
        %v1013 = vadd.f32 %v1012, %v861
        %v1014 = vadd.f32 %v1013, %v865
        %v1015 = vadd.f32 %v1014, %v869
        %v1016 = vadd.f32 %v1015, %v873
        %v1017 = vadd.f32 %v1016, %v877
        %v1018 = vadd.f32 %v1017, %v881
        %v1019 = vadd.f32 %v1018, %v885
        %v1020 = vadd.f32 %v1019, %v889
        %v1021 = vadd.f32 %v1020, %v893
        %v1022 = vadd.f32 %v1021, %v897
        %v1023 = vadd.f32 %v1022, %v901
        %v1024 = vadd.f32 %v1023, %v905
        %v1025 = vadd.f32 %v1024, %v909
        %v1026 = vadd.f32 %v1025, %v913
        %v1027 = vadd.f32 %v1026, %v917
        %v1028 = vadd.f32 %v1027, %v921
        %v1029 = vadd.f32 %v1028, %v925
        %v1030 = vadd.f32 %v1029, %v929
        %v1031 = vadd.f32 %v1030, %v933
        %v1032 = vadd.f32 %v1031, %v937
        %v1033 = vadd.f32 %v1032, %v941
        %v1034 = vadd.f32 %v1033, %v945
        %v1035 = vadd.f32 %v1034, %v949
        %v1036 = vadd.f32 %v1035, %v953
        %v1037 = vadd.f32 %v1036, %v957
        %v1038 = vadd.f32 %v1037, %v961
        %v1039 = vadd.f32 %v1038, %v965
        %v1040 = vadd.f32 %v1039, %v969
        %v1041 = vadd.f32 %v1040, %v973
        %v1042 = vrot.slane %v1041, 4
        %v1043 = vadd.f32 %v1041, %v1042
        %v1044 = vrot.slane %v1043, 2
        %v1045 = vadd.f32 %v1043, %v1044
        %v1046 = vrot.slane %v1045, 1
        %v1047 = vadd.f32 %v1045, %v1046
        %v1048 = vld [vmem:[%s348] sm:$0xf]
        %v1049 = vpack.c.bf16 %v851, %v847
        %v1050 = vpack.c.bf16 %v853, %v849
        %v1051 = vpack.c.bf16 %v859, %v855
        %v1052 = vpack.c.bf16 %v861, %v857
        %v1053 = vpack.c.bf16 %v867, %v863
        %v1054 = vpack.c.bf16 %v869, %v865
        %v1055 = vpack.c.bf16 %v875, %v871
        %v1056 = vpack.c.bf16 %v877, %v873
        %v1057 = vpack.c.bf16 %v883, %v879
        %v1058 = vpack.c.bf16 %v885, %v881
        %v1059 = vpack.c.bf16 %v891, %v887
        %v1060 = vpack.c.bf16 %v893, %v889
        %v1061 = vpack.c.bf16 %v899, %v895
        %v1062 = vpack.c.bf16 %v901, %v897
        %v1063 = vpack.c.bf16 %v907, %v903
        %v1064 = vpack.c.bf16 %v909, %v905
        %v1065 = vpack.c.bf16 %v915, %v911
        %v1066 = vpack.c.bf16 %v917, %v913
        %v1067 = vpack.c.bf16 %v923, %v919
        %v1068 = vpack.c.bf16 %v925, %v921
        %v1069 = vpack.c.bf16 %v931, %v927
        %v1070 = vpack.c.bf16 %v933, %v929
        %v1071 = vpack.c.bf16 %v939, %v935
        %v1072 = vpack.c.bf16 %v941, %v937
        %v1073 = vpack.c.bf16 %v947, %v943
        %v1074 = vpack.c.bf16 %v949, %v945
        %v1075 = vpack.c.bf16 %v955, %v951
        %v1076 = vpack.c.bf16 %v957, %v953
        %v1077 = vpack.c.bf16 %v963, %v959
        %v1078 = vpack.c.bf16 %v965, %v961
        %v1079 = vpack.c.bf16 %v971, %v967
        %v1080 = vpack.c.bf16 %v973, %v969
        %v1083 = vunpack.c.l.s4 1983009808
        %v1084 = vunpack.c.0.s8 %v1083
        %v1085 = vlaneseq
        %v1086 = vshrl.u32 %v1085, 7
        %v1087 = vsub.s32 %v1084, %v1086
        %v1088 = vrot.slane %v1048, %v1087
        %v1089 = vcombine.high %v1088, %v1088
        %1092 = vmatprep.subr.bf16.mxu0 %v1050
        %1093 = vmatpush1.bf16.msra.mxu0 %v1049
        %1094 = vmatprep.subr.bf16.mxu0 %v1052
        %1095 = vmatpush1.bf16.msra.mxu0 %v1051
        %1096 = vmatprep.subr.bf16.mxu0 %v1054
        %1097 = vmatpush1.bf16.msra.mxu0 %v1053
        %1098 = vmatprep.subr.bf16.mxu0 %v1056
        %1099 = vmatpush1.bf16.msra.mxu0 %v1055
        %1100 = vmatprep.subr.bf16.mxu0 %v1058
        %1101 = vmatpush1.bf16.msra.mxu0 %v1057
        %1102 = vmatprep.subr.bf16.mxu0 %v1060
        %1103 = vmatpush1.bf16.msra.mxu0 %v1059
        %1104 = vmatprep.subr.bf16.mxu0 %v1062
        %1105 = vmatpush1.bf16.msra.mxu0 %v1061
        %1106 = vmatprep.subr.bf16.mxu0 %v1064
        %1107 = vmatpush1.bf16.msra.mxu0 %v1063
        %1108 = vmatprep.subr.bf16.mxu0 %v1066
        %1109 = vmatpush1.bf16.msra.mxu0 %v1065
        %1110 = vmatprep.subr.bf16.mxu0 %v1068
        %1111 = vmatpush1.bf16.msra.mxu0 %v1067
        %1112 = vmatprep.subr.bf16.mxu0 %v1070
        %1113 = vmatpush1.bf16.msra.mxu0 %v1069
        %1114 = vmatprep.subr.bf16.mxu0 %v1072
        %1115 = vmatpush1.bf16.msra.mxu0 %v1071
        %1116 = vmatprep.subr.bf16.mxu0 %v1074
        %1117 = vmatpush1.bf16.msra.mxu0 %v1073
        %1118 = vmatprep.subr.bf16.mxu0 %v1076
        %1119 = vmatpush1.bf16.msra.mxu0 %v1075
        %1120 = vmatprep.subr.bf16.mxu0 %v1078
        %1121 = vmatpush1.bf16.msra.mxu0 %v1077
        %1122 = vmatprep.subr.bf16.mxu0 %v1080
        %1123 = vmatpush1.bf16.msra.mxu0 %v1079
        %1124 = vmatprep.mubr.bf16.mxu0 %v1089
        %1125 = vmatmul.mubr.bf16.gmra.mrb[0].mxu0 %v1088
        %v1126 = vpop.f32.mrb[0].mxu0
        %v1127 = vadd.f32 0.0, %v1126
        %v1128 = vpop.f32.mrb[0].mxu0
        %v1129 = vadd.f32 0.0, %v1128
        %v1130 = vpop.f32.mrb[0].mxu0
        %v1131 = vpop.f32.mrb[0].mxu0
        %1132 = vdwg.mxu0
        %v1133 = vrcp.pop %v1010
        %v1134 = vrcp.pop %v1047
        %v1135 = vmul.f32 %v1127, %v1133
        %v1136 = vmul.f32 %v1129, %v1134
        %v1137 = vld [vmem:[%s4] sm:$0xf]
        %v1138 = vld [vmem:[%s357] sm:$0xff]
        %v1140 = vcombine.high %v1138, %v1138
        %v1142 = vsel %vm459, %v1137, 0
        %vm1144 = vcmask 1043456
        %v1145 = vsel %vm1144, %v1138, 0
        %v1147 = vsel %vm1144, %v1140, 0
        %1149 = vmatprep.subr.mxu0 %v1147
        %1150 = vmatpush1.msra.mxu0 %v1145
        %1151 = vmatprep.subr.mxu0 0.0
        %1152 = vmatpush1.msra.mxu0 0.0
        %1153 = vmatprep.subr.mxu0 0.0
        %1154 = vmatpush1.msra.mxu0 0.0
        %1155 = vmatprep.subr.mxu0 0.0
        %1156 = vmatpush1.msra.mxu0 0.0
        %1157 = vmatprep.subr.mxu0 0.0
        %1158 = vmatpush1.msra.mxu0 0.0
        %1159 = vmatprep.subr.mxu0 0.0
        %1160 = vmatpush1.msra.mxu0 0.0
        %1161 = vmatprep.subr.mxu0 0.0
        %1162 = vmatpush1.msra.mxu0 0.0
        %1163 = vmatprep.subr.mxu0 0.0
        %1164 = vmatpush1.msra.mxu0 0.0
        %1165 = vmatprep.subr.mxu0 0.0
        %1166 = vmatpush1.msra.mxu0 0.0
        %1167 = vmatprep.subr.mxu0 0.0
        %1168 = vmatpush1.msra.mxu0 0.0
        %1169 = vmatprep.subr.mxu0 0.0
        %1170 = vmatpush1.msra.mxu0 0.0
        %1171 = vmatprep.subr.mxu0 0.0
        %1172 = vmatpush1.msra.mxu0 0.0
        %1173 = vmatprep.subr.mxu0 0.0
        %1174 = vmatpush1.msra.mxu0 0.0
        %1175 = vmatprep.subr.mxu0 0.0
        %1176 = vmatpush1.msra.mxu0 0.0
        %1177 = vmatprep.subr.mxu0 0.0
        %1178 = vmatpush1.msra.mxu0 0.0
        %1179 = vmatprep.subr.mxu0 0.0
        %1180 = vmatpush1.msra.mxu0 0.0
        %1181 = vmatprep.subr.mxu0 0.0
        %1182 = vmatpush1.msra.mxu0 0.0
        %1183 = vmatprep.subr.mxu0 0.0
        %1184 = vmatpush1.msra.mxu0 0.0
        %1185 = vmatprep.subr.mxu0 0.0
        %1186 = vmatpush1.msra.mxu0 0.0
        %1187 = vmatprep.subr.mxu0 0.0
        %1188 = vmatpush1.msra.mxu0 0.0
        %1189 = vmatprep.subr.mxu0 0.0
        %1190 = vmatpush1.msra.mxu0 0.0
        %1191 = vmatprep.subr.mxu0 0.0
        %1192 = vmatpush1.msra.mxu0 0.0
        %1193 = vmatprep.subr.mxu0 0.0
        %1194 = vmatpush1.msra.mxu0 0.0
        %1195 = vmatprep.subr.mxu0 0.0
        %1196 = vmatpush1.msra.mxu0 0.0
        %1197 = vmatprep.subr.mxu0 0.0
        %1198 = vmatpush1.msra.mxu0 0.0
        %1199 = vmatprep.subr.mxu0 0.0
        %1200 = vmatpush1.msra.mxu0 0.0
        %1201 = vmatprep.subr.mxu0 0.0
        %1202 = vmatpush1.msra.mxu0 0.0
        %1203 = vmatprep.subr.mxu0 0.0
        %1204 = vmatpush1.msra.mxu0 0.0
        %1205 = vmatprep.subr.mxu0 0.0
        %1206 = vmatpush1.msra.mxu0 0.0
        %1207 = vmatprep.subr.mxu0 0.0
        %1208 = vmatpush1.msra.mxu0 0.0
        %1209 = vmatprep.subr.mxu0 0.0
        %1210 = vmatpush1.msra.mxu0 0.0
        %1211 = vmatprep.subr.mxu0 0.0
        %1212 = vmatpush1.msra.mxu0 0.0
        %1213 = vmatprep.mubr.f32.mxu0 0.0
        %1214 = vmatmul.mubr.f32.gmra.mrb[0].mxu0 %v1142
        %v1215 = vpop.f32.mrb[0].mxu0
        %v1216 = vadd.f32 0.0, %v1215
        %v1217 = vpop.f32.mrb[0].mxu0
        %v1218 = vadd.f32 0.0, %v1217
        %1219 = vdwg.mxu0
        %v1220 = vadd.f32 %v1135, %v1216
        %v1221 = vadd.f32 %v1136, %v1218
        %v1222 = vld [vmem:[%s5] sm:$0xf]
        %1224 = vset.pattern.permute.xlu0 0
        %1225 = vperm.xlu0 %1224, %v1222
        %v1226 = vpop.permute.xlu0 %1225
        %v1228 = vadd.f32 %v1220, %v1226
        %v1229 = vadd.f32 %v1221, %v1226
        %v1232 = vcombine.low %v1228, %v1229
        %1234 = vst [vmem:[%s400] sm:$0xff] %v1232
        %s1235 = sand.u32 %s201, 1
        %s1236 = scalar_lea.sflag [#allocation4], %s1235
        %s1237 = sand.u32 %s201, 1
        %s1238 = smul.addr %s1237, 8
        %s1239 = scalar_lea.vmem [#allocation10], %s1238
        // Predicated region
        $region61: #{tpu_custom_call.1} parent=43 // pred_check
          %p1240 = pneg %p211
        $region62: #{tpu_custom_call.1} parent=43 // pred_check_branch
          %1242 = sbr.rel (%p1240) target = $region64
        $region63: #{tpu_custom_call.1} parent=43 // pred_region
          %s1243 = smul.u32 2, %s34
          %s1245 = ssub.s32 128, 128
          %1246 = vsyncadd %s1236, %s1245
          %s1247 = smul.addr %s33, 2
          %s1248 = sadd.s32 %s1243, %s1247
          %s1249 = smul.addr %s1248, 64
          %s1250 = scalar_lea.hbm %s6, %s1249
          %s1252 = sshll.u32 %s1239, 4
          %s1253 = int_to_ptr.vmem [resolvable:$true] %s1252
          %1255 = dma.vmem_to_hbm [thread:$0]  %s1253, 128, %s1250, %s1236
        $region64: #{tpu_custom_call.1} parent=43 // pred_fallthru
          _
      $region44: #{tpu_custom_call.1} parent=5 // pred_fallthru
        _
      %p1256 = scmp.le.s32.totalorder 2, %s24
      // Predicated region
      $region65: #{tpu_custom_call.1} parent=5 // pred_check
        %p1257 = pneg %p1256
      $region66: #{tpu_custom_call.1} parent=5 // pred_check_branch
        %1259 = sbr.rel (%p1257) target = $region68
      $region67: #{tpu_custom_call.1} parent=5 // pred_region
        %s1260 = ssub.s32 %s24, 2
        // Predicated region
        $region69: #{tpu_custom_call.1} parent=67 // pred_check
          %p1261 = pneg %p217
        $region70: #{tpu_custom_call.1} parent=67 // pred_check_branch
          %1263 = sbr.rel (%p1261) target = $region72
        $region71: #{tpu_custom_call.1} parent=67 // pred_region
          %s1264 = sand.u32 %s202, 1
          %s1265 = scalar_lea.sflag [#allocation4], %s1264
          %s1266 = sand.u32 %s202, 1
          %s1267 = smul.addr %s1266, 8
          %s1268 = scalar_lea.vmem [#allocation10], %s1267
          %1269 = dma.done %s1265, 128
        $region72: #{tpu_custom_call.1} parent=67 // pred_fallthru
          _
      $region68: #{tpu_custom_call.1} parent=5 // pred_fallthru
        _
    $region6: #{tpu_custom_call.1} parent=1 // loop_footer
      %s28 = sadd.s32 1, %s24
    $region7: #{tpu_custom_call.1} parent=1 // loop_footer_branch
      %23 = sbr.rel target = $region3
    $region8: #{tpu_custom_call.1} parent=1 // loop_exit
      _
    %1270 = vsyncpa [#allocation3], 1
    %s1271 = scalar_lea.sflag [#allocation3], 1
    %1272 = vsyncpa %s1271, 1
    %1273 = vsyncpa [#allocation6], 1
    %s1274 = scalar_lea.sflag [#allocation6], 1
    %1275 = vsyncpa %s1274, 1
    %1276 = vsyncpa [#allocation9], 1
    %s1277 = scalar_lea.sflag [#allocation9], 1
    %1278 = vsyncpa %s1277, 1
    %1279 = vsyncpa [#allocation4], 1
    %s1280 = scalar_lea.sflag [#allocation4], 1
    %1281 = vsyncpa %s1280, 1

</llo_original>
